<compile_context>
chip_gen: v5e
topology: v5e:2x2
jax: 0.10.0
libtpu: 0.0.40
codegen_flags: <defaults>
</compile_context>

<pallas_src>
import functools

import numpy as np
import jax
import jax.numpy as jnp
from jax import lax
from jax.experimental import pallas as pl
from jax.experimental.pallas import tpu as pltpu


def _residual_block_kernel(
    idx_ref,   # (2, L)  int32 : per-lane (row, col) spatial indices within an image
    p1_ref,    # (Cin_k, L) bf16 slab (stride==1)  OR  (K*K*Cin_k, L) bf16 im2col
    w1_ref,    # (2*Cout, K*K*Cin_k) bf16 : scale-folded conv1 | 1x1 downsample (centre tap)
    b1_ref,    # (2*Cout, 1) f32          : fused bias (conv bias + BN shift)
    w2_ref,    # (Cout, K*K*Cout) bf16    : scale-folded conv2 (bn2 applied TWICE)
    b2_ref,    # (Cout, 1) f32
    o_ref,     # (NB, Cout, Ho*Wo) f32    : output, already NCHW (spatial flattened on lanes)
    *, K, pad, Ho, Wo, NB, Cout, conv1_from_slab,
):
    L = NB * Ho * Wo
    HoWo = Ho * Wo
    f32 = jnp.float32
    bf16 = jnp.bfloat16

    row = idx_ref[0:1, :]          # (1, L) int32, row within image
    col = idx_ref[1:2, :]          # (1, L) int32, col within image

    # Per-tap halo masks generated in-kernel (VPU compares on the tiny index slab;
    # no (K*K, L) f32 mask DMA).  Shared by conv1 and conv2 (same geometry).
    masks = {}
    for kh in range(K):
        for kw in range(K):
            dh, dw = kh - pad, kw - pad
            if dh == 0 and dw == 0:
                continue
            conds = []
            if dh != 0:
                conds += [row >= -dh, row < Ho - dh]
            if dw != 0:
                conds += [col >= -dw, col < Wo - dw]
            m = conds[0]
            for c in conds[1:]:
                m = m & c
            masks[(kh, kw)] = m.astype(f32)

    def build_patches(h):
        # h: (C, L) f32, C a multiple of 8.  Returns (K*K*C, L) f32: block (kh,kw)
        # holds h shifted to tap (kh,kw); out-of-image positions zeroed by mask.
        pieces = []
        for kh in range(K):
            for kw in range(K):
                delta = (kh - pad) * Wo + (kw - pad)
                if delta == 0:
                    pieces.append(h)                                   # centre tap
                else:
                    shifted = pltpu.roll(h, shift=(-delta) % L, axis=1)  # XLU, no copies
                    pieces.append(shifted * masks[(kh, kw)])
        return jnp.concatenate(pieces, axis=0)                         # 8-row aligned concat

    # ---- conv1 + fused 1x1 downsample: ONE MXU matmul ----
    if conv1_from_slab:
        x = p1_ref[...].astype(f32)                    # (Cin_k, L)
        p1 = build_patches(x).astype(bf16)             # (K*K*Cin_k, L)
    else:
        p1 = p1_ref[...]                               # pre-built im2col patches (stride > 1)
    z = jnp.dot(w1_ref[...], p1, preferred_element_type=f32) + b1_ref[...]   # (2C, L)
    h1 = jnp.maximum(z[:Cout, :], 0.0)                 # bn1 -> dropout1(eval) -> relu
    idn = z[Cout:, :]                                  # downsample conv + bnd (no relu)

    # ---- conv2 (stride 1, same padding) from registers: roll + mask + one matmul ----
    p2 = build_patches(h1).astype(bf16)                # (K*K*Cout, L)
    acc2 = jnp.dot(w2_ref[...], p2, preferred_element_type=f32)              # (C, L)
    out = jnp.maximum(acc2 + b2_ref[...] + idn, 0.0)   # bn2(x2) + identity -> relu

    # Lane-dense unmasked stores (Cout x Ho*Wo per image), already NCHW.
    for b in range(NB):
        o_ref[b] = out[:, b * HoWo:(b + 1) * HoWo]


def residual_block_forward(x_nchw, params, *, kernel, stride):
    """Fused ResidualBlock forward (eval semantics). Input/output are NCHW f32."""
    N, Cin, H, W = x_nchw.shape
    Cout = params["w1"].shape[0]
    K = kernel
    pad = K // 2
    Ho = (H + 2 * pad - K) // stride + 1
    Wo = (W + 2 * pad - K) // stride + 1
    eps = 1e-5
    f32 = jnp.float32
    bf16 = jnp.bfloat16

    # -------- device-aware grid: one big step on single-TC chips (v5e/v6e);
    #          even "parallel" batch split only on v7x (2 TensorCores / chip) ------
    try:
        kind = jax.devices()[0].device_kind.lower()
    except Exception:
        kind = ""
    two_cores = ("v7" in kind) or ("7x" in kind)
    steps = 1
    if two_cores and N >= 2 and N % 2 == 0 and ((N // 2) * Ho * Wo) % 128 == 0:
        steps = 2
    # TODO(synk): on v7x with odd batch / non-128-divisible lane extent, split along
    # Ho-row chunks instead so both TensorCores stay busy.
    NB = N // steps
    L = NB * Ho * Wo

    # -------- conv1 operand --------
    if stride == 1:
        conv1_from_slab = True
        Cin_k = ((Cin + 7) // 8) * 8                       # pad channels -> aligned sublane concat
        xs = jnp.transpose(x_nchw, (1, 0, 2, 3)).reshape(Cin, N * H * W)
        if Cin_k != Cin:
            xs = jnp.concatenate(
                [xs, jnp.zeros((Cin_k - Cin, N * H * W), xs.dtype)], axis=0)
        p1_in = xs.astype(bf16)                            # (Cin_k, N*H*W) lane-dense slab
        p1_spec = pl.BlockSpec((Cin_k, L), lambda i: (0, i))
    else:
        conv1_from_slab = False
        Cin_k = Cin
        # stride>1 fallback: wrapper-side im2col (tap-major, channel-minor).
        x = jnp.transpose(x_nchw, (0, 2, 3, 1)).astype(bf16)        # (N,H,W,Cin)
        xp = jnp.pad(x, ((0, 0), (pad, pad), (pad, pad), (0, 0)))
        cols = []
        for kh in range(K):
            for kw in range(K):
                cols.append(lax.slice(
                    xp, (0, kh, kw, 0),
                    (N, kh + (Ho - 1) * stride + 1, kw + (Wo - 1) * stride + 1, Cin),
                    (1, stride, stride, 1)))
        patches = jnp.concatenate(cols, axis=-1)                    # (N,Ho,Wo,K*K*Cin)
        p1_in = jnp.transpose(patches, (3, 0, 1, 2)).reshape(K * K * Cin, N * Ho * Wo)
        p1_spec = pl.BlockSpec((K * K * Cin, L), lambda i: (0, i))

    # -------- constant folding: BN affines + conv biases; per-channel scales folded
    #          into the f32 weights before the bf16 cast (epilogue = plain add) ------
    def bn_fold(g, b, m, v):
        s = (g / jnp.sqrt(v + eps)).astype(f32)
        return s, (b - m * s).astype(f32)

    s1, t1 = bn_fold(params["bn1_g"], params["bn1_b"], params["bn1_m"], params["bn1_v"])
    s2, t2 = bn_fold(params["bn2_g"], params["bn2_b"], params["bn2_m"], params["bn2_v"])
    sd, td = bn_fold(params["bnd_g"], params["bnd_b"], params["bnd_m"], params["bnd_v"])
    b1 = params["b1"].astype(f32)
    b2 = params["b2"].astype(f32)
    bd = params["bd"].astype(f32)

    # conv1 weights (scale-folded, channel-padded) + 1x1 downsample rows at the centre tap.
    w1_sc = params["w1"].astype(f32) * s1[:, None, None, None]          # (Cout,Cin,K,K)
    w1_padw = jnp.zeros((Cout, Cin_k, K, K), f32).at[:, :Cin].set(w1_sc)
    w1_t = jnp.transpose(w1_padw, (0, 2, 3, 1)).reshape(Cout, K * K * Cin_k)
    centre = (pad * K + pad) * Cin_k
    wd_sc = params["wd"][:, :, 0, 0].astype(f32) * sd[:, None]          # (Cout,Cin)
    wd_rows = jnp.zeros((Cout, K * K * Cin_k), f32).at[:, centre:centre + Cin].set(wd_sc)
    w1_aug = jnp.concatenate([w1_t, wd_rows], axis=0).astype(bf16)      # (2C, K*K*Cin_k)

    # conv2 weights with bn2 applied TWICE (scale s2^2) folded in.
    w2_sc = params["w2"].astype(f32) * (s2 * s2)[:, None, None, None]
    w2_t = jnp.transpose(w2_sc, (0, 2, 3, 1)).reshape(Cout, K * K * Cout).astype(bf16)

    bias1 = jnp.concatenate([s1 * b1 + t1, sd * bd + td]).reshape(2 * Cout, 1)
    bias2 = ((s2 * s2) * b2 + (s2 + 1.0) * t2).reshape(Cout, 1)

    # -------- tiny (2, L) int32 row/col slab: halo masks are generated in-kernel ------
    t = np.arange(L)
    pos = t % (Ho * Wo)
    rowcol = jnp.asarray(np.stack([pos // Wo, pos % Wo]).astype(np.int32))   # (2, L)

    kern = functools.partial(_residual_block_kernel, K=K, pad=pad, Ho=Ho, Wo=Wo,
                             NB=NB, Cout=Cout, conv1_from_slab=conv1_from_slab)

    def bcast(shape):
        return pl.BlockSpec(shape, lambda i, _s=shape: tuple(0 for _ in _s))

    flops = 2 * N * Ho * Wo * (K * K * Cin * 2 * Cout + K * K * Cout * Cout)
    bytes_accessed = (p1_in.size * 2 + w1_aug.size * 2 + w2_t.size * 2
                      + rowcol.size * 4 + 3 * Cout * 4 + N * Cout * Ho * Wo * 4)

    # NOTE: at production CNN sizes add a lane-axis (spatial) grid dimension and set
    # vmem_limit_bytes explicitly; pick roughly half the lane tile on v7x (64 MiB VMEM)
    # compared to v5e/v6e, keeping tiles >= ~512 lanes to stay near the HBM roofline.
    out = pl.pallas_call(
        kern,
        out_shape=jax.ShapeDtypeStruct((N, Cout, Ho * Wo), f32),
        grid_spec=pltpu.PrefetchScalarGridSpec(
            num_scalar_prefetch=0,
            grid=(steps,),
            in_specs=[
                bcast((2, L)),                               # row/col index slab
                p1_spec,                                     # x slab (stride 1) or im2col
                bcast((2 * Cout, K * K * Cin_k)),            # conv1 | downsample weights
                bcast((2 * Cout, 1)),                        # fused bias
                bcast((Cout, K * K * Cout)),                 # conv2 weights (bn2 x2 folded)
                bcast((Cout, 1)),                            # fused bias
            ],
            out_specs=pl.BlockSpec((NB, Cout, Ho * Wo), lambda i: (i, 0, 0)),
        ),
        compiler_params=pltpu.CompilerParams(dimension_semantics=("parallel",)),
        cost_estimate=pl.CostEstimate(flops=flops, transcendentals=0,
                                      bytes_accessed=bytes_accessed),
    )(rowcol, p1_in, w1_aug, bias1, w2_t, bias2)

    # Kernel output is already N, C, (H*W): only a metadata reshape remains.
    return out.reshape(N, Cout, Ho, Wo)


def ref_forward(x, p, *, kernel, stride):
    """Plain-JAX reference matching the PyTorch forward() in eval mode."""
    eps = 1e-5
    pad = kernel // 2

    def conv(x, w, b, s, pd):
        y = lax.conv_general_dilated(
            x, w, (s, s), [(pd, pd), (pd, pd)],
            dimension_numbers=("NCHW", "OIHW", "NCHW"))
        return y + b.reshape(1, -1, 1, 1)

    def bn(x, g, b, m, v):
        r = lambda a: a.reshape(1, -1, 1, 1)
        return r(g) * (x - r(m)) / jnp.sqrt(r(v) + eps) + r(b)

    identity = x
    h = conv(x, p["w1"], p["b1"], stride, pad)
    h = bn(h, p["bn1_g"], p["bn1_b"], p["bn1_m"], p["bn1_v"])
    h = jnp.maximum(h, 0.0)
    h = conv(h, p["w2"], p["b2"], 1, pad)
    h = bn(h, p["bn2_g"], p["bn2_b"], p["bn2_m"], p["bn2_v"])
    h = bn(h, p["bn2_g"], p["bn2_b"], p["bn2_m"], p["bn2_v"])   # bn2 applied twice, as in forward()
    idn = conv(identity, p["wd"], p["bd"], stride, 0)
    idn = bn(idn, p["bnd_g"], p["bnd_b"], p["bnd_m"], p["bnd_v"])
    return jnp.maximum(h + idn, 0.0)


if __name__ == "__main__":
    N, Cin, Cout, H, W, K, stride = 2, 4, 8, 16, 16, 3, 1

    key = jax.random.PRNGKey(0)
    ks = jax.random.split(key, 20)

    def nrm(k, shape, scale=0.1):
        return (scale * jax.random.normal(k, shape)).astype(jnp.float32)

    params = dict(
        w1=nrm(ks[0], (Cout, Cin, K, K)), b1=nrm(ks[1], (Cout,)),
        bn1_g=1.0 + nrm(ks[2], (Cout,)), bn1_b=nrm(ks[3], (Cout,)),
        bn1_m=nrm(ks[4], (Cout,)), bn1_v=0.5 + jnp.abs(nrm(ks[5], (Cout,), 1.0)),
        w2=nrm(ks[6], (Cout, Cout, K, K)), b2=nrm(ks[7], (Cout,)),
        bn2_g=1.0 + nrm(ks[8], (Cout,)), bn2_b=nrm(ks[9], (Cout,)),
        bn2_m=nrm(ks[10], (Cout,)), bn2_v=0.5 + jnp.abs(nrm(ks[11], (Cout,), 1.0)),
        wd=nrm(ks[12], (Cout, Cin, 1, 1)), bd=nrm(ks[13], (Cout,)),
        bnd_g=1.0 + nrm(ks[14], (Cout,)), bnd_b=nrm(ks[15], (Cout,)),
        bnd_m=nrm(ks[16], (Cout,)), bnd_v=0.5 + jnp.abs(nrm(ks[17], (Cout,), 1.0)),
    )
    x = jax.random.normal(ks[18], (N, Cin, H, W), dtype=jnp.float32)

    out = jax.block_until_ready(residual_block_forward(x, params, kernel=K, stride=stride))
    ref = jax.block_until_ready(ref_forward(x, params, kernel=K, stride=stride))

    assert out.shape == ref.shape, (out.shape, ref.shape)
    max_err = float(jnp.max(jnp.abs(out - ref)))
    # bf16 matmul operands (with BN scales folded into the bf16 weights) and f32
    # accumulation vs an all-f32 reference.
    assert bool(jnp.allclose(out, ref, atol=7.5e-2, rtol=5e-2)), max_err

    # TODO(synk): training-mode Dropout2d / batch-statistics BatchNorm are not
    # implemented; the kernel reproduces eval-mode forward semantics (including
    # the reference's intentional double application of bn2).
    print("KERNEL_OK")
</pallas_src>

<mosaic_0001>
module attributes {stable_mosaic.version = 11 : i64} {
  func.func @_residual_block_kernel(%arg0: i32, %arg1: memref<2x512xi32, #tpu.memory_space<vmem>>, %arg2: memref<8x512xbf16, #tpu.memory_space<vmem>>, %arg3: memref<16x72xbf16, #tpu.memory_space<vmem>>, %arg4: memref<16x1xf32, #tpu.memory_space<vmem>>, %arg5: memref<8x72xbf16, #tpu.memory_space<vmem>>, %arg6: memref<8x1xf32, #tpu.memory_space<vmem>>, %arg7: memref<2x8x256xf32, #tpu.memory_space<vmem>>) attributes {dimension_semantics = [#tpu.dimension_semantics<parallel>], iteration_bounds = array<i64: 1>, scalar_prefetch = 0 : i64, scratch_operands = 0 : i64, tpu.core_type = #tpu.core_type<tc>, window_params = [{pipeline_mode = #tpu.pipeline_mode<synchronous>, transform_indices = @transform_0, window_bounds = array<i64: 2, 512>}, {transform_indices = @transform_1, window_bounds = array<i64: 8, 512>}, {pipeline_mode = #tpu.pipeline_mode<synchronous>, transform_indices = @transform_2, window_bounds = array<i64: 16, 72>}, {pipeline_mode = #tpu.pipeline_mode<synchronous>, transform_indices = @transform_3, window_bounds = array<i64: 16, 1>}, {pipeline_mode = #tpu.pipeline_mode<synchronous>, transform_indices = @transform_4, window_bounds = array<i64: 8, 72>}, {pipeline_mode = #tpu.pipeline_mode<synchronous>, transform_indices = @transform_5, window_bounds = array<i64: 8, 1>}, {transform_indices = @transform_6, window_bounds = array<i64: 2, 8, 256>}]} {
    %c0 = arith.constant 0 : index
    %c0_0 = arith.constant 0 : index
    %0 = vector.load %arg1[%c0, %c0_0] : memref<2x512xi32, #tpu.memory_space<vmem>>, vector<1x512xi32>
    %c1 = arith.constant 1 : index
    %c0_1 = arith.constant 0 : index
    %1 = vector.load %arg1[%c1, %c0_1] : memref<2x512xi32, #tpu.memory_space<vmem>>, vector<1x512xi32>
    %c1_i32 = arith.constant 1 : i32
    %2 = vector.broadcast %c1_i32 : i32 to vector<1x512xi32>
    %3 = arith.cmpi sge, %0, %2 : vector<1x512xi32>
    %c17_i32 = arith.constant 17 : i32
    %4 = vector.broadcast %c17_i32 : i32 to vector<1x512xi32>
    %5 = arith.cmpi slt, %0, %4 : vector<1x512xi32>
    %c1_i32_2 = arith.constant 1 : i32
    %6 = vector.broadcast %c1_i32_2 : i32 to vector<1x512xi32>
    %7 = arith.cmpi sge, %1, %6 : vector<1x512xi32>
    %c17_i32_3 = arith.constant 17 : i32
    %8 = vector.broadcast %c17_i32_3 : i32 to vector<1x512xi32>
    %9 = arith.cmpi slt, %1, %8 : vector<1x512xi32>
    %10 = arith.andi %3, %5 : vector<1x512xi1>
    %11 = arith.andi %10, %7 : vector<1x512xi1>
    %12 = arith.andi %11, %9 : vector<1x512xi1>
    %13 = arith.extui %12 : vector<1x512xi1> to vector<1x512xi32>
    %14 = arith.sitofp %13 : vector<1x512xi32> to vector<1x512xf32>
    %c1_i32_4 = arith.constant 1 : i32
    %15 = vector.broadcast %c1_i32_4 : i32 to vector<1x512xi32>
    %16 = arith.cmpi sge, %0, %15 : vector<1x512xi32>
    %c17_i32_5 = arith.constant 17 : i32
    %17 = vector.broadcast %c17_i32_5 : i32 to vector<1x512xi32>
    %18 = arith.cmpi slt, %0, %17 : vector<1x512xi32>
    %19 = arith.andi %16, %18 : vector<1x512xi1>
    %20 = arith.extui %19 : vector<1x512xi1> to vector<1x512xi32>
    %21 = arith.sitofp %20 : vector<1x512xi32> to vector<1x512xf32>
    %c1_i32_6 = arith.constant 1 : i32
    %22 = vector.broadcast %c1_i32_6 : i32 to vector<1x512xi32>
    %23 = arith.cmpi sge, %0, %22 : vector<1x512xi32>
    %c17_i32_7 = arith.constant 17 : i32
    %24 = vector.broadcast %c17_i32_7 : i32 to vector<1x512xi32>
    %25 = arith.cmpi slt, %0, %24 : vector<1x512xi32>
    %c-1_i32 = arith.constant -1 : i32
    %26 = vector.broadcast %c-1_i32 : i32 to vector<1x512xi32>
    %27 = arith.cmpi sge, %1, %26 : vector<1x512xi32>
    %c15_i32 = arith.constant 15 : i32
    %28 = vector.broadcast %c15_i32 : i32 to vector<1x512xi32>
    %29 = arith.cmpi slt, %1, %28 : vector<1x512xi32>
    %30 = arith.andi %23, %25 : vector<1x512xi1>
    %31 = arith.andi %30, %27 : vector<1x512xi1>
    %32 = arith.andi %31, %29 : vector<1x512xi1>
    %33 = arith.extui %32 : vector<1x512xi1> to vector<1x512xi32>
    %34 = arith.sitofp %33 : vector<1x512xi32> to vector<1x512xf32>
    %c1_i32_8 = arith.constant 1 : i32
    %35 = vector.broadcast %c1_i32_8 : i32 to vector<1x512xi32>
    %36 = arith.cmpi sge, %1, %35 : vector<1x512xi32>
    %c17_i32_9 = arith.constant 17 : i32
    %37 = vector.broadcast %c17_i32_9 : i32 to vector<1x512xi32>
    %38 = arith.cmpi slt, %1, %37 : vector<1x512xi32>
    %39 = arith.andi %36, %38 : vector<1x512xi1>
    %40 = arith.extui %39 : vector<1x512xi1> to vector<1x512xi32>
    %41 = arith.sitofp %40 : vector<1x512xi32> to vector<1x512xf32>
    %c-1_i32_10 = arith.constant -1 : i32
    %42 = vector.broadcast %c-1_i32_10 : i32 to vector<1x512xi32>
    %43 = arith.cmpi sge, %1, %42 : vector<1x512xi32>
    %c15_i32_11 = arith.constant 15 : i32
    %44 = vector.broadcast %c15_i32_11 : i32 to vector<1x512xi32>
    %45 = arith.cmpi slt, %1, %44 : vector<1x512xi32>
    %46 = arith.andi %43, %45 : vector<1x512xi1>
    %47 = arith.extui %46 : vector<1x512xi1> to vector<1x512xi32>
    %48 = arith.sitofp %47 : vector<1x512xi32> to vector<1x512xf32>
    %c-1_i32_12 = arith.constant -1 : i32
    %49 = vector.broadcast %c-1_i32_12 : i32 to vector<1x512xi32>
    %50 = arith.cmpi sge, %0, %49 : vector<1x512xi32>
    %c15_i32_13 = arith.constant 15 : i32
    %51 = vector.broadcast %c15_i32_13 : i32 to vector<1x512xi32>
    %52 = arith.cmpi slt, %0, %51 : vector<1x512xi32>
    %c1_i32_14 = arith.constant 1 : i32
    %53 = vector.broadcast %c1_i32_14 : i32 to vector<1x512xi32>
    %54 = arith.cmpi sge, %1, %53 : vector<1x512xi32>
    %c17_i32_15 = arith.constant 17 : i32
    %55 = vector.broadcast %c17_i32_15 : i32 to vector<1x512xi32>
    %56 = arith.cmpi slt, %1, %55 : vector<1x512xi32>
    %57 = arith.andi %50, %52 : vector<1x512xi1>
    %58 = arith.andi %57, %54 : vector<1x512xi1>
    %59 = arith.andi %58, %56 : vector<1x512xi1>
    %60 = arith.extui %59 : vector<1x512xi1> to vector<1x512xi32>
    %61 = arith.sitofp %60 : vector<1x512xi32> to vector<1x512xf32>
    %c-1_i32_16 = arith.constant -1 : i32
    %62 = vector.broadcast %c-1_i32_16 : i32 to vector<1x512xi32>
    %63 = arith.cmpi sge, %0, %62 : vector<1x512xi32>
    %c15_i32_17 = arith.constant 15 : i32
    %64 = vector.broadcast %c15_i32_17 : i32 to vector<1x512xi32>
    %65 = arith.cmpi slt, %0, %64 : vector<1x512xi32>
    %66 = arith.andi %63, %65 : vector<1x512xi1>
    %67 = arith.extui %66 : vector<1x512xi1> to vector<1x512xi32>
    %68 = arith.sitofp %67 : vector<1x512xi32> to vector<1x512xf32>
    %c-1_i32_18 = arith.constant -1 : i32
    %69 = vector.broadcast %c-1_i32_18 : i32 to vector<1x512xi32>
    %70 = arith.cmpi sge, %0, %69 : vector<1x512xi32>
    %c15_i32_19 = arith.constant 15 : i32
    %71 = vector.broadcast %c15_i32_19 : i32 to vector<1x512xi32>
    %72 = arith.cmpi slt, %0, %71 : vector<1x512xi32>
    %c-1_i32_20 = arith.constant -1 : i32
    %73 = vector.broadcast %c-1_i32_20 : i32 to vector<1x512xi32>
    %74 = arith.cmpi sge, %1, %73 : vector<1x512xi32>
    %c15_i32_21 = arith.constant 15 : i32
    %75 = vector.broadcast %c15_i32_21 : i32 to vector<1x512xi32>
    %76 = arith.cmpi slt, %1, %75 : vector<1x512xi32>
    %77 = arith.andi %70, %72 : vector<1x512xi1>
    %78 = arith.andi %77, %74 : vector<1x512xi1>
    %79 = arith.andi %78, %76 : vector<1x512xi1>
    %80 = arith.extui %79 : vector<1x512xi1> to vector<1x512xi32>
    %81 = arith.sitofp %80 : vector<1x512xi32> to vector<1x512xf32>
    %c0_22 = arith.constant 0 : index
    %c0_23 = arith.constant 0 : index
    %82 = vector.load %arg2[%c0_22, %c0_23] : memref<8x512xbf16, #tpu.memory_space<vmem>>, vector<8x512xbf16>
    %83 = arith.extf %82 : vector<8x512xbf16> to vector<8x512xf32>
    %c17_i32_24 = arith.constant 17 : i32
    %84 = tpu.dynamic_rotate %83 by %c17_i32_24 dim 1 : vector<8x512xf32>, i32 -> vector<8x512xf32>
    %85 = vector.broadcast %14 : vector<1x512xf32> to vector<8x512xf32>
    %86 = arith.mulf %84, %85 : vector<8x512xf32>
    %c16_i32 = arith.constant 16 : i32
    %87 = tpu.dynamic_rotate %83 by %c16_i32 dim 1 : vector<8x512xf32>, i32 -> vector<8x512xf32>
    %88 = vector.broadcast %21 : vector<1x512xf32> to vector<8x512xf32>
    %89 = arith.mulf %87, %88 : vector<8x512xf32>
    %c15_i32_25 = arith.constant 15 : i32
    %90 = tpu.dynamic_rotate %83 by %c15_i32_25 dim 1 : vector<8x512xf32>, i32 -> vector<8x512xf32>
    %91 = vector.broadcast %34 : vector<1x512xf32> to vector<8x512xf32>
    %92 = arith.mulf %90, %91 : vector<8x512xf32>
    %c1_i32_26 = arith.constant 1 : i32
    %93 = tpu.dynamic_rotate %83 by %c1_i32_26 dim 1 : vector<8x512xf32>, i32 -> vector<8x512xf32>
    %94 = vector.broadcast %41 : vector<1x512xf32> to vector<8x512xf32>
    %95 = arith.mulf %93, %94 : vector<8x512xf32>
    %c511_i32 = arith.constant 511 : i32
    %96 = tpu.dynamic_rotate %83 by %c511_i32 dim 1 : vector<8x512xf32>, i32 -> vector<8x512xf32>
    %97 = vector.broadcast %48 : vector<1x512xf32> to vector<8x512xf32>
    %98 = arith.mulf %96, %97 : vector<8x512xf32>
    %c497_i32 = arith.constant 497 : i32
    %99 = tpu.dynamic_rotate %83 by %c497_i32 dim 1 : vector<8x512xf32>, i32 -> vector<8x512xf32>
    %100 = vector.broadcast %61 : vector<1x512xf32> to vector<8x512xf32>
    %101 = arith.mulf %99, %100 : vector<8x512xf32>
    %c496_i32 = arith.constant 496 : i32
    %102 = tpu.dynamic_rotate %83 by %c496_i32 dim 1 : vector<8x512xf32>, i32 -> vector<8x512xf32>
    %103 = vector.broadcast %68 : vector<1x512xf32> to vector<8x512xf32>
    %104 = arith.mulf %102, %103 : vector<8x512xf32>
    %c495_i32 = arith.constant 495 : i32
    %105 = tpu.dynamic_rotate %83 by %c495_i32 dim 1 : vector<8x512xf32>, i32 -> vector<8x512xf32>
    %106 = vector.broadcast %81 : vector<1x512xf32> to vector<8x512xf32>
    %107 = arith.mulf %105, %106 : vector<8x512xf32>
    %108 = tpu.concatenate %86, %89, %92, %95, %83, %98, %101, %104, %107 in 0 : vector<8x512xf32>, vector<8x512xf32>, vector<8x512xf32>, vector<8x512xf32>, vector<8x512xf32>, vector<8x512xf32>, vector<8x512xf32>, vector<8x512xf32>, vector<8x512xf32> -> vector<72x512xf32>
    %109 = arith.truncf %108 : vector<72x512xf32> to vector<72x512xbf16>
    %c0_27 = arith.constant 0 : index
    %c0_28 = arith.constant 0 : index
    %110 = vector.load %arg3[%c0_27, %c0_28] : memref<16x72xbf16, #tpu.memory_space<vmem>>, vector<16x72xbf16>
    %cst = arith.constant dense<0.000000e+00> : vector<16x512xf32>
    %111 = tpu.matmul %110, %109, %cst {dimension_numbers = #tpu.dot_dimension_numbers<[1], [0], [0], [1], [0, 0, 1, 1], [], []>} : vector<16x72xbf16>, vector<72x512xbf16>, vector<16x512xf32> -> vector<16x512xf32>
    %c0_29 = arith.constant 0 : index
    %c0_30 = arith.constant 0 : index
    %112 = vector.load %arg4[%c0_29, %c0_30] : memref<16x1xf32, #tpu.memory_space<vmem>>, vector<16x1xf32>
    %113 = vector.broadcast %112 : vector<16x1xf32> to vector<16x512xf32>
    %114 = arith.addf %111, %113 : vector<16x512xf32>
    %115 = vector.extract_strided_slice %114 {offsets = [0, 0], sizes = [8, 512], strides = [1, 1]} : vector<16x512xf32> to vector<8x512xf32>
    %cst_31 = arith.constant 0.000000e+00 : f32
    %116 = vector.broadcast %cst_31 : f32 to vector<8x512xf32>
    %117 = arith.maximumf %115, %116 : vector<8x512xf32>
    %118 = vector.extract_strided_slice %114 {offsets = [8, 0], sizes = [8, 512], strides = [1, 1]} : vector<16x512xf32> to vector<8x512xf32>
    %c17_i32_32 = arith.constant 17 : i32
    %119 = tpu.dynamic_rotate %117 by %c17_i32_32 dim 1 : vector<8x512xf32>, i32 -> vector<8x512xf32>
    %120 = vector.broadcast %14 : vector<1x512xf32> to vector<8x512xf32>
    %121 = arith.mulf %119, %120 : vector<8x512xf32>
    %c16_i32_33 = arith.constant 16 : i32
    %122 = tpu.dynamic_rotate %117 by %c16_i32_33 dim 1 : vector<8x512xf32>, i32 -> vector<8x512xf32>
    %123 = vector.broadcast %21 : vector<1x512xf32> to vector<8x512xf32>
    %124 = arith.mulf %122, %123 : vector<8x512xf32>
    %c15_i32_34 = arith.constant 15 : i32
    %125 = tpu.dynamic_rotate %117 by %c15_i32_34 dim 1 : vector<8x512xf32>, i32 -> vector<8x512xf32>
    %126 = vector.broadcast %34 : vector<1x512xf32> to vector<8x512xf32>
    %127 = arith.mulf %125, %126 : vector<8x512xf32>
    %c1_i32_35 = arith.constant 1 : i32
    %128 = tpu.dynamic_rotate %117 by %c1_i32_35 dim 1 : vector<8x512xf32>, i32 -> vector<8x512xf32>
    %129 = vector.broadcast %41 : vector<1x512xf32> to vector<8x512xf32>
    %130 = arith.mulf %128, %129 : vector<8x512xf32>
    %c511_i32_36 = arith.constant 511 : i32
    %131 = tpu.dynamic_rotate %117 by %c511_i32_36 dim 1 : vector<8x512xf32>, i32 -> vector<8x512xf32>
    %132 = vector.broadcast %48 : vector<1x512xf32> to vector<8x512xf32>
    %133 = arith.mulf %131, %132 : vector<8x512xf32>
    %c497_i32_37 = arith.constant 497 : i32
    %134 = tpu.dynamic_rotate %117 by %c497_i32_37 dim 1 : vector<8x512xf32>, i32 -> vector<8x512xf32>
    %135 = vector.broadcast %61 : vector<1x512xf32> to vector<8x512xf32>
    %136 = arith.mulf %134, %135 : vector<8x512xf32>
    %c496_i32_38 = arith.constant 496 : i32
    %137 = tpu.dynamic_rotate %117 by %c496_i32_38 dim 1 : vector<8x512xf32>, i32 -> vector<8x512xf32>
    %138 = vector.broadcast %68 : vector<1x512xf32> to vector<8x512xf32>
    %139 = arith.mulf %137, %138 : vector<8x512xf32>
    %c495_i32_39 = arith.constant 495 : i32
    %140 = tpu.dynamic_rotate %117 by %c495_i32_39 dim 1 : vector<8x512xf32>, i32 -> vector<8x512xf32>
    %141 = vector.broadcast %81 : vector<1x512xf32> to vector<8x512xf32>
    %142 = arith.mulf %140, %141 : vector<8x512xf32>
    %143 = tpu.concatenate %121, %124, %127, %130, %117, %133, %136, %139, %142 in 0 : vector<8x512xf32>, vector<8x512xf32>, vector<8x512xf32>, vector<8x512xf32>, vector<8x512xf32>, vector<8x512xf32>, vector<8x512xf32>, vector<8x512xf32>, vector<8x512xf32> -> vector<72x512xf32>
    %144 = arith.truncf %143 : vector<72x512xf32> to vector<72x512xbf16>
    %c0_40 = arith.constant 0 : index
    %c0_41 = arith.constant 0 : index
    %145 = vector.load %arg5[%c0_40, %c0_41] : memref<8x72xbf16, #tpu.memory_space<vmem>>, vector<8x72xbf16>
    %cst_42 = arith.constant dense<0.000000e+00> : vector<8x512xf32>
    %146 = tpu.matmul %145, %144, %cst_42 {dimension_numbers = #tpu.dot_dimension_numbers<[1], [0], [0], [1], [0, 0, 1, 1], [], []>} : vector<8x72xbf16>, vector<72x512xbf16>, vector<8x512xf32> -> vector<8x512xf32>
    %c0_43 = arith.constant 0 : index
    %c0_44 = arith.constant 0 : index
    %147 = vector.load %arg6[%c0_43, %c0_44] : memref<8x1xf32, #tpu.memory_space<vmem>>, vector<8x1xf32>
    %148 = vector.broadcast %147 : vector<8x1xf32> to vector<8x512xf32>
    %149 = arith.addf %146, %148 : vector<8x512xf32>
    %150 = arith.addf %149, %118 : vector<8x512xf32>
    %cst_45 = arith.constant 0.000000e+00 : f32
    %151 = vector.broadcast %cst_45 : f32 to vector<8x512xf32>
    %152 = arith.maximumf %150, %151 : vector<8x512xf32>
    %153 = vector.extract_strided_slice %152 {offsets = [0, 0], sizes = [8, 256], strides = [1, 1]} : vector<8x512xf32> to vector<8x256xf32>
    %c0_46 = arith.constant 0 : index
    %c0_47 = arith.constant 0 : index
    %c0_48 = arith.constant 0 : index
    %154 = vector.load %arg7[%c0_46, %c0_47, %c0_48] : memref<2x8x256xf32, #tpu.memory_space<vmem>>, vector<1x8x256xf32>
    %155 = vector.shape_cast %154 : vector<1x8x256xf32> to vector<8x256xf32>
    %156 = vector.shape_cast %153 : vector<8x256xf32> to vector<1x8x256xf32>
    tpu.vector_store %arg7[%c0_46, %c0_47, %c0_48], %156 {strides = array<i32>} : memref<2x8x256xf32, #tpu.memory_space<vmem>>, vector<1x8x256xf32>,
    %157 = vector.extract_strided_slice %152 {offsets = [0, 256], sizes = [8, 256], strides = [1, 1]} : vector<8x512xf32> to vector<8x256xf32>
    %c1_49 = arith.constant 1 : index
    %c0_50 = arith.constant 0 : index
    %c0_51 = arith.constant 0 : index
    %158 = vector.load %arg7[%c1_49, %c0_50, %c0_51] : memref<2x8x256xf32, #tpu.memory_space<vmem>>, vector<1x8x256xf32>
    %159 = vector.shape_cast %158 : vector<1x8x256xf32> to vector<8x256xf32>
    %160 = vector.shape_cast %157 : vector<8x256xf32> to vector<1x8x256xf32>
    tpu.vector_store %arg7[%c1_49, %c0_50, %c0_51], %160 {strides = array<i32>} : memref<2x8x256xf32, #tpu.memory_space<vmem>>, vector<1x8x256xf32>,
    return
  }
  func.func @transform_0(%arg0: i32) -> (i32, i32) {
    %c0_i32 = arith.constant 0 : i32
    %c0_i32_0 = arith.constant 0 : i32
    %c0_i32_1 = arith.constant 0 : i32
    return %c0_i32, %c0_i32_0 : i32, i32
  }
  func.func @transform_1(%arg0: i32) -> (i32, i32) {
    %c0_i32 = arith.constant 0 : i32
    %c0_i32_0 = arith.constant 0 : i32
    return %c0_i32, %arg0 : i32, i32
  }
  func.func @transform_2(%arg0: i32) -> (i32, i32) {
    %c0_i32 = arith.constant 0 : i32
    %c0_i32_0 = arith.constant 0 : i32
    %c0_i32_1 = arith.constant 0 : i32
    return %c0_i32, %c0_i32_0 : i32, i32
  }
  func.func @transform_3(%arg0: i32) -> (i32, i32) {
    %c0_i32 = arith.constant 0 : i32
    %c0_i32_0 = arith.constant 0 : i32
    %c0_i32_1 = arith.constant 0 : i32
    return %c0_i32, %c0_i32_0 : i32, i32
  }
  func.func @transform_4(%arg0: i32) -> (i32, i32) {
    %c0_i32 = arith.constant 0 : i32
    %c0_i32_0 = arith.constant 0 : i32
    %c0_i32_1 = arith.constant 0 : i32
    return %c0_i32, %c0_i32_0 : i32, i32
  }
  func.func @transform_5(%arg0: i32) -> (i32, i32) {
    %c0_i32 = arith.constant 0 : i32
    %c0_i32_0 = arith.constant 0 : i32
    %c0_i32_1 = arith.constant 0 : i32
    return %c0_i32, %c0_i32_0 : i32, i32
  }
  func.func @transform_6(%arg0: i32) -> (i32, i32, i32) {
    %c0_i32 = arith.constant 0 : i32
    %c0_i32_0 = arith.constant 0 : i32
    %c0_i32_1 = arith.constant 0 : i32
    return %arg0, %c0_i32, %c0_i32_0 : i32, i32, i32
  }
}

</mosaic_0001>

<llo_original>
// kernel: tpu_custom_call.1
$region0: #{tpu_custom_call.1}
  #allocation0 [shape = 'u32[]', space=smem, size = 0x4, offset = 0x4, fixed_abs, tag = 'smem constant byte address 0x4 - core index']
  #allocation1 [shape = 'u32[72,128]{1,0:T(1,128)}', space=vmem, size = 0x9000, scoped, tag = 'internal scratch']
  %s0 = inlined_call_operand.vmem [shape: s32[2,512], index: 0, kind: input, shape index: {}]
  %s1 = inlined_call_operand.vmem [shape: bf16[8,512], index: 1, kind: input, shape index: {}]
  %s2 = inlined_call_operand.hbm [shape: bf16[16,72], index: 2, kind: input, shape index: {}]
  %s3 = inlined_call_operand.vmem [shape: f32[16,1], index: 3, kind: input, shape index: {}]
  %s4 = inlined_call_operand.vmem [shape: bf16[8,72], index: 4, kind: input, shape index: {}]
  %s5 = inlined_call_operand.vmem [shape: f32[8,1], index: 5, kind: input, shape index: {}]
  %s6 = inlined_call_operand.hbm [shape: f32[2,8,256], index: 6, kind: output, shape index: {}]
  %s7 = sld [smem:[#allocation0]]
  $region38: #{tpu_custom_call.1} parent=0
    _
  %s9 = ssub.s32 1, %s7
  %s10 = scalar_select 0, %s9, %s7
  $region1: #{tpu_custom_call.1} parent=0
    #allocation2 [shape = 'u8[4096]{0}', space=vmem, size = 0x1000, scoped, tag = 'input window, operand 2, single buffered']
    #allocation3 [shape = 's32[1]{0}', space=sflag, size = 0x4, scoped, tag = 'scoped memory for tpu_custom_call.1']
    #allocation4 [shape = 's32[1]{0}', space=sflag, size = 0x4, scoped, tag = 'scoped memory for tpu_custom_call.1']
    #allocation5 [shape = 'u8[16384]{0}', space=vmem, size = 0x4000, scoped, tag = 'output window, operand 0, single buffered']
    %11 = vsyncpa [#allocation3], 0
    %12 = vsyncpa [#allocation4], 0
    // Predicated region
    $region2: #{tpu_custom_call.1} parent=1 // pred_check
      _
    $region3: #{tpu_custom_call.1} parent=1 // pred_check_branch
      %14 = sbr.rel (0) target = $region5
    $region4: #{tpu_custom_call.1} parent=1 // pred_region
      _
    $region5: #{tpu_custom_call.1} parent=1 // pred_fallthru
      _
    // Predicated region
    $region6: #{tpu_custom_call.1} parent=1 // pred_check
      _
    $region7: #{tpu_custom_call.1} parent=1 // pred_check_branch
      %16 = sbr.rel (0) target = $region9
    $region8: #{tpu_custom_call.1} parent=1 // pred_region
      _
    $region9: #{tpu_custom_call.1} parent=1 // pred_fallthru
      _
    // Predicated region
    $region10: #{tpu_custom_call.1} parent=1 // pred_check
      _
    $region11: #{tpu_custom_call.1} parent=1 // pred_check_branch
      %18 = sbr.rel (0) target = $region13
    $region12: #{tpu_custom_call.1} parent=1 // pred_region
      %20 = vsyncadd [#allocation3], 0
      %s21 = sshll.u32 %s2, 4
      %s22 = int_to_ptr.hbm [resolvable:$true] %s21
      %s23 = sshll.u32 [#allocation2], 4
      %s24 = int_to_ptr.vmem [resolvable:$true] %s23
      %29 = dma.hbm_to_vmem [thread:$0]  %s22, 128, %s24, [#allocation3], 64, 64, 4
    $region13: #{tpu_custom_call.1} parent=1 // pred_fallthru
      _
    // Predicated region
    $region14: #{tpu_custom_call.1} parent=1 // pred_check
      _
    $region15: #{tpu_custom_call.1} parent=1 // pred_check_branch
      %31 = sbr.rel (0) target = $region17
    $region16: #{tpu_custom_call.1} parent=1 // pred_region
      _
    $region17: #{tpu_custom_call.1} parent=1 // pred_fallthru
      _
    // Predicated region
    $region18: #{tpu_custom_call.1} parent=1 // pred_check
      _
    $region19: #{tpu_custom_call.1} parent=1 // pred_check_branch
      %33 = sbr.rel (0) target = $region21
    $region20: #{tpu_custom_call.1} parent=1 // pred_region
      _
    $region21: #{tpu_custom_call.1} parent=1 // pred_fallthru
      _
    // Predicated region
    $region22: #{tpu_custom_call.1} parent=1 // pred_check
      _
    $region23: #{tpu_custom_call.1} parent=1 // pred_check_branch
      %35 = sbr.rel (0) target = $region25
    $region24: #{tpu_custom_call.1} parent=1 // pred_region
      _
    $region25: #{tpu_custom_call.1} parent=1 // pred_fallthru
      _
    // Predicated region
    $region26: #{tpu_custom_call.1} parent=1 // pred_check
      _
    $region27: #{tpu_custom_call.1} parent=1 // pred_check_branch
      %37 = sbr.rel (0) target = $region29
    $region28: #{tpu_custom_call.1} parent=1 // pred_region
      %39 = dma.done [#allocation3], 128
    $region29: #{tpu_custom_call.1} parent=1 // pred_fallthru
      _
    %v41 = vld [vmem:[%s0] ss:$2 sm:$0xf]
    %s42 = scalar_lea.vmem %s0, 1
    %v43 = vld [vmem:[%s42] ss:$2 sm:$0xf]
    %vm44 = vcmp.ge.s32.totalorder %v41, 1
    %vm45 = vcmp.lt.s32.totalorder %v41, 17
    %vm46 = vcmp.ge.s32.totalorder %v43, 1
    %vm47 = vcmp.lt.s32.totalorder %v43, 17
    %vm48 = vmand %vm44, %vm45
    %vm49 = vmand %vm48, %vm46
    %vm50 = vmand %vm49, %vm47
    %v51 = vsel %vm50, 1, 0
    %v52 = vcvt.s32.f32 %v51
    %v53 = vsel %vm48, 1, 0
    %v54 = vcvt.s32.f32 %v53
    %vm55 = vcmp.ge.s32.totalorder %v43, 4294967295
    %vm56 = vcmp.lt.s32.totalorder %v43, 15
    %vm57 = vmand %vm48, %vm55
    %vm58 = vmand %vm57, %vm56
    %v59 = vsel %vm58, 1, 0
    %v60 = vcvt.s32.f32 %v59
    %vm61 = vmand %vm46, %vm47
    %v62 = vsel %vm61, 1, 0
    %v63 = vcvt.s32.f32 %v62
    %vm64 = vmand %vm55, %vm56
    %v65 = vsel %vm64, 1, 0
    %v66 = vcvt.s32.f32 %v65
    %vm67 = vcmp.ge.s32.totalorder %v41, 4294967295
    %vm68 = vcmp.lt.s32.totalorder %v41, 15
    %vm69 = vmand %vm67, %vm68
    %vm70 = vmand %vm69, %vm46
    %vm71 = vmand %vm70, %vm47
    %v72 = vsel %vm71, 1, 0
    %v73 = vcvt.s32.f32 %v72
    %v74 = vsel %vm69, 1, 0
    %v75 = vcvt.s32.f32 %v74
    %vm76 = vmand %vm69, %vm55
    %vm77 = vmand %vm76, %vm56
    %v78 = vsel %vm77, 1, 0
    %v79 = vcvt.s32.f32 %v78
    %v80 = vld [vmem:[%s1] sm:$0xff]
    %v81 = vld [vmem:[%s1 + $0x8] sm:$0xff]
    %v82 = vunpack.c.l.bf16 %v80
    %v83 = vunpack.c.h.bf16 %v80
    %v84 = vunpack.c.l.bf16 %v81
    %v85 = vunpack.c.h.bf16 %v81
    %86 = vrot.lane.b32.xlu0 %v82, 17
    %v87 = vpop.permute.xlu0 %86
    %88 = vrot.lane.b32.xlu0 %v83, 17
    %v89 = vpop.permute.xlu0 %88
    %90 = vrot.lane.b32.xlu0 %v84, 17
    %v91 = vpop.permute.xlu0 %90
    %92 = vrot.lane.b32.xlu0 %v85, 17
    %v93 = vpop.permute.xlu0 %92
    %v94 = vlaneseq
    %v95 = vand.u32 %v94, 127
    %vm96 = vcmp.lt.s32.totalorder %v95, 17
    %v97 = vsel %vm96, %v91, %v93
    %v98 = vsel %vm96, %v89, %v91
    %v99 = vsel %vm96, %v87, %v89
    %v100 = vsel %vm96, %v93, %v87
    %v102 = vperm.slane %v52, 0
    %v103 = vperm.slane %v52, 1
    %v104 = vperm.slane %v52, 2
    %v105 = vperm.slane %v52, 3
    %v110 = vmul.f32 %v100, %v102
    %v111 = vmul.f32 %v99, %v103
    %v112 = vmul.f32 %v98, %v104
    %v113 = vmul.f32 %v97, %v105
    %114 = vrot.lane.b32.xlu0 %v82, 16
    %v115 = vpop.permute.xlu0 %114
    %116 = vrot.lane.b32.xlu0 %v83, 16
    %v117 = vpop.permute.xlu0 %116
    %118 = vrot.lane.b32.xlu0 %v84, 16
    %v119 = vpop.permute.xlu0 %118
    %120 = vrot.lane.b32.xlu0 %v85, 16
    %v121 = vpop.permute.xlu0 %120
    %vm122 = vcmp.lt.s32.totalorder %v95, 16
    %v123 = vsel %vm122, %v119, %v121
    %v124 = vsel %vm122, %v117, %v119
    %v125 = vsel %vm122, %v115, %v117
    %v126 = vsel %vm122, %v121, %v115
    %v128 = vperm.slane %v54, 0
    %v129 = vperm.slane %v54, 1
    %v130 = vperm.slane %v54, 2
    %v131 = vperm.slane %v54, 3
    %v136 = vmul.f32 %v126, %v128
    %v137 = vmul.f32 %v125, %v129
    %v138 = vmul.f32 %v124, %v130
    %v139 = vmul.f32 %v123, %v131
    %140 = vrot.lane.b32.xlu0 %v82, 15
    %v141 = vpop.permute.xlu0 %140
    %142 = vrot.lane.b32.xlu0 %v83, 15
    %v143 = vpop.permute.xlu0 %142
    %144 = vrot.lane.b32.xlu0 %v84, 15
    %v145 = vpop.permute.xlu0 %144
    %146 = vrot.lane.b32.xlu0 %v85, 15
    %v147 = vpop.permute.xlu0 %146
    %vm148 = vcmp.lt.s32.totalorder %v95, 15
    %v149 = vsel %vm148, %v145, %v147
    %v150 = vsel %vm148, %v143, %v145
    %v151 = vsel %vm148, %v141, %v143
    %v152 = vsel %vm148, %v147, %v141
    %v154 = vperm.slane %v60, 0
    %v155 = vperm.slane %v60, 1
    %v156 = vperm.slane %v60, 2
    %v157 = vperm.slane %v60, 3
    %v162 = vmul.f32 %v152, %v154
    %v163 = vmul.f32 %v151, %v155
    %v164 = vmul.f32 %v150, %v156
    %v165 = vmul.f32 %v149, %v157
    %166 = vrot.lane.b32.xlu0 %v82, 1
    %v167 = vpop.permute.xlu0 %166
    %168 = vrot.lane.b32.xlu0 %v83, 1
    %v169 = vpop.permute.xlu0 %168
    %170 = vrot.lane.b32.xlu0 %v84, 1
    %v171 = vpop.permute.xlu0 %170
    %172 = vrot.lane.b32.xlu0 %v85, 1
    %v173 = vpop.permute.xlu0 %172
    %vm174 = vcmp.lt.s32.totalorder %v95, 1
    %v175 = vsel %vm174, %v171, %v173
    %v176 = vsel %vm174, %v169, %v171
    %v177 = vsel %vm174, %v167, %v169
    %v178 = vsel %vm174, %v173, %v167
    %v180 = vperm.slane %v63, 0
    %v181 = vperm.slane %v63, 1
    %v182 = vperm.slane %v63, 2
    %v183 = vperm.slane %v63, 3
    %v188 = vmul.f32 %v178, %v180
    %v189 = vmul.f32 %v177, %v181
    %v190 = vmul.f32 %v176, %v182
    %v191 = vmul.f32 %v175, %v183
    %192 = vrot.lane.b32.xlu0 %v82, 127
    %v193 = vpop.permute.xlu0 %192
    %194 = vrot.lane.b32.xlu0 %v83, 127
    %v195 = vpop.permute.xlu0 %194
    %196 = vrot.lane.b32.xlu0 %v84, 127
    %v197 = vpop.permute.xlu0 %196
    %198 = vrot.lane.b32.xlu0 %v85, 127
    %v199 = vpop.permute.xlu0 %198
    %vm200 = vcmp.lt.s32.totalorder %v95, 127
    %v201 = vsel %vm200, %v197, %v199
    %v202 = vsel %vm200, %v195, %v197
    %v203 = vsel %vm200, %v193, %v195
    %v204 = vsel %vm200, %v199, %v193
    %v206 = vperm.slane %v66, 0
    %v207 = vperm.slane %v66, 1
    %v208 = vperm.slane %v66, 2
    %v209 = vperm.slane %v66, 3
    %v214 = vmul.f32 %v203, %v206
    %v215 = vmul.f32 %v202, %v207
    %v216 = vmul.f32 %v201, %v208
    %v217 = vmul.f32 %v204, %v209
    %218 = vrot.lane.b32.xlu0 %v82, 113
    %v219 = vpop.permute.xlu0 %218
    %220 = vrot.lane.b32.xlu0 %v83, 113
    %v221 = vpop.permute.xlu0 %220
    %222 = vrot.lane.b32.xlu0 %v84, 113
    %v223 = vpop.permute.xlu0 %222
    %224 = vrot.lane.b32.xlu0 %v85, 113
    %v225 = vpop.permute.xlu0 %224
    %vm226 = vcmp.lt.s32.totalorder %v95, 113
    %v227 = vsel %vm226, %v223, %v225
    %v228 = vsel %vm226, %v221, %v223
    %v229 = vsel %vm226, %v219, %v221
    %v230 = vsel %vm226, %v225, %v219
    %v232 = vperm.slane %v73, 0
    %v233 = vperm.slane %v73, 1
    %v234 = vperm.slane %v73, 2
    %v235 = vperm.slane %v73, 3
    %v240 = vmul.f32 %v229, %v232
    %v241 = vmul.f32 %v228, %v233
    %v242 = vmul.f32 %v227, %v234
    %v243 = vmul.f32 %v230, %v235
    %244 = vrot.lane.b32.xlu0 %v82, 112
    %v245 = vpop.permute.xlu0 %244
    %246 = vrot.lane.b32.xlu0 %v83, 112
    %v247 = vpop.permute.xlu0 %246
    %248 = vrot.lane.b32.xlu0 %v84, 112
    %v249 = vpop.permute.xlu0 %248
    %250 = vrot.lane.b32.xlu0 %v85, 112
    %v251 = vpop.permute.xlu0 %250
    %vm252 = vcmp.lt.s32.totalorder %v95, 112
    %v253 = vsel %vm252, %v249, %v251
    %v254 = vsel %vm252, %v247, %v249
    %v255 = vsel %vm252, %v245, %v247
    %v256 = vsel %vm252, %v251, %v245
    %v258 = vperm.slane %v75, 0
    %v259 = vperm.slane %v75, 1
    %v260 = vperm.slane %v75, 2
    %v261 = vperm.slane %v75, 3
    %v266 = vmul.f32 %v255, %v258
    %v267 = vmul.f32 %v254, %v259
    %v268 = vmul.f32 %v253, %v260
    %v269 = vmul.f32 %v256, %v261
    %270 = vrot.lane.b32.xlu0 %v82, 111
    %v271 = vpop.permute.xlu0 %270
    %272 = vrot.lane.b32.xlu0 %v83, 111
    %v273 = vpop.permute.xlu0 %272
    %274 = vrot.lane.b32.xlu0 %v84, 111
    %v275 = vpop.permute.xlu0 %274
    %276 = vrot.lane.b32.xlu0 %v85, 111
    %v277 = vpop.permute.xlu0 %276
    %vm278 = vcmp.lt.s32.totalorder %v95, 111
    %v279 = vsel %vm278, %v275, %v277
    %v280 = vsel %vm278, %v273, %v275
    %v281 = vsel %vm278, %v271, %v273
    %v282 = vsel %vm278, %v277, %v271
    %v284 = vperm.slane %v79, 0
    %v285 = vperm.slane %v79, 1
    %v286 = vperm.slane %v79, 2
    %v287 = vperm.slane %v79, 3
    %v292 = vmul.f32 %v281, %v284
    %v293 = vmul.f32 %v280, %v285
    %v294 = vmul.f32 %v279, %v286
    %v295 = vmul.f32 %v282, %v287
    %v296 = vpack.c.bf16 %v136, %v110
    %v297 = vpack.c.bf16 %v137, %v111
    %v298 = vpack.c.bf16 %v138, %v112
    %v299 = vpack.c.bf16 %v139, %v113
    %v300 = vpack.c.bf16 %v188, %v162
    %v301 = vpack.c.bf16 %v189, %v163
    %v302 = vpack.c.bf16 %v190, %v164
    %v303 = vpack.c.bf16 %v191, %v165
    %v304 = vpack.c.bf16 %v214, %v82
    %v305 = vpack.c.bf16 %v215, %v83
    %v306 = vpack.c.bf16 %v216, %v84
    %v307 = vpack.c.bf16 %v217, %v85
    %v308 = vpack.c.bf16 %v266, %v240
    %v309 = vpack.c.bf16 %v267, %v241
    %v310 = vpack.c.bf16 %v268, %v242
    %v311 = vpack.c.bf16 %v269, %v243
    %v312 = vpack.c.bf16 %v292, %v292
    %v313 = vpack.c.bf16 %v293, %v293
    %v314 = vpack.c.bf16 %v294, %v294
    %v315 = vpack.c.bf16 %v295, %v295
    %v316 = vld [vmem:[#allocation2] sm:$0xf]
    %v317 = vld [vmem:[#allocation2 + $0x4] sm:$0xf]
    %v318 = vld [vmem:[%s3] sm:$0xff]
    %v319 = vld [vmem:[%s3 + $0x8] sm:$0xff]
    %321 = vset.pattern.permute.xlu0 0
    %322 = vperm.xlu0 %321, %v318
    %v323 = vpop.permute.xlu0 %322
    %326 = vset.pattern.permute.xlu0 0
    %327 = vperm.xlu0 %326, %v319
    %v328 = vpop.permute.xlu0 %327
    %v332 = vunpack.c.l.b16 %v316
    %v333 = vunpack.c.l.b16 %v317
    %v334 = vpack.c.b16 %v333, %v332
    %vm335 = vcmask 588800
    %v337 = vsel %vm335, %v334, 0
    %vm339 = vcmask 1043456
    %v341 = vsel %vm339, %v312, 0
    %v344 = vsel %vm339, %v313, 0
    %v347 = vsel %vm339, %v314, 0
    %v350 = vsel %vm339, %v315, 0
    %352 = vmatpush.bf16.msra.mxu0 0
    %353 = vmatpush.bf16.msra.mxu0 0
    %354 = vmatpush.bf16.msra.mxu0 0
    %355 = vmatpush.bf16.msra.mxu0 %v341
    %356 = vmatpush.bf16.msra.mxu0 %v308
    %357 = vmatpush.bf16.msra.mxu0 %v304
    %358 = vmatpush.bf16.msra.mxu0 %v300
    %359 = vmatpush.bf16.msra.mxu0 %v296
    %360 = vmatmul.bf16.gmra.mxu0 %v337
    %v361 = vpop.f32.mrf.mxu0
    %v362 = vadd.f32 %v323, %v361
    %v363 = vpop.f32.mrf.mxu0
    %v364 = vadd.f32 %v328, %v363
    %365 = vdwg.mxu0
    %366 = vmatpush.bf16.msra.mxu0 0
    %367 = vmatpush.bf16.msra.mxu0 0
    %368 = vmatpush.bf16.msra.mxu0 0
    %369 = vmatpush.bf16.msra.mxu0 %v344
    %370 = vmatpush.bf16.msra.mxu0 %v309
    %371 = vmatpush.bf16.msra.mxu0 %v305
    %372 = vmatpush.bf16.msra.mxu0 %v301
    %373 = vmatpush.bf16.msra.mxu0 %v297
    %374 = vmatmul.bf16.gmra.mxu0 %v337
    %v375 = vpop.f32.mrf.mxu0
    %v376 = vadd.f32 %v323, %v375
    %v377 = vpop.f32.mrf.mxu0
    %v378 = vadd.f32 %v328, %v377
    %379 = vdwg.mxu0
    %380 = vmatpush.bf16.msra.mxu0 0
    %381 = vmatpush.bf16.msra.mxu0 0
    %382 = vmatpush.bf16.msra.mxu0 0
    %383 = vmatpush.bf16.msra.mxu0 %v347
    %384 = vmatpush.bf16.msra.mxu0 %v310
    %385 = vmatpush.bf16.msra.mxu0 %v306
    %386 = vmatpush.bf16.msra.mxu0 %v302
    %387 = vmatpush.bf16.msra.mxu0 %v298
    %388 = vmatmul.bf16.gmra.mxu0 %v337
    %v389 = vpop.f32.mrf.mxu0
    %v390 = vadd.f32 %v323, %v389
    %v391 = vpop.f32.mrf.mxu0
    %v392 = vadd.f32 %v328, %v391
    %393 = vdwg.mxu0
    %394 = vmatpush.bf16.msra.mxu0 0
    %395 = vmatpush.bf16.msra.mxu0 0
    %396 = vmatpush.bf16.msra.mxu0 0
    %397 = vmatpush.bf16.msra.mxu0 %v350
    %398 = vmatpush.bf16.msra.mxu0 %v311
    %399 = vmatpush.bf16.msra.mxu0 %v307
    %400 = vmatpush.bf16.msra.mxu0 %v303
    %401 = vmatpush.bf16.msra.mxu0 %v299
    %402 = vmatmul.bf16.gmra.mxu0 %v337
    %v403 = vpop.f32.mrf.mxu0
    %v404 = vadd.f32 %v323, %v403
    %v405 = vpop.f32.mrf.mxu0
    %v406 = vadd.f32 %v328, %v405
    %407 = vdwg.mxu0
    %v408 = vmax.f32 %v362, 0.0
    %v409 = vmax.f32 %v376, 0.0
    %v410 = vmax.f32 %v390, 0.0
    %v411 = vmax.f32 %v404, 0.0
    %412 = vrot.lane.b32.xlu0 %v408, 17
    %v413 = vpop.permute.xlu0 %412
    %414 = vrot.lane.b32.xlu0 %v409, 17
    %v415 = vpop.permute.xlu0 %414
    %416 = vrot.lane.b32.xlu0 %v410, 17
    %v417 = vpop.permute.xlu0 %416
    %418 = vrot.lane.b32.xlu0 %v411, 17
    %v419 = vpop.permute.xlu0 %418
    %v420 = vsel %vm96, %v417, %v419
    %v421 = vsel %vm96, %v415, %v417
    %v422 = vsel %vm96, %v413, %v415
    %v423 = vsel %vm96, %v419, %v413
    %v424 = vmul.f32 %v423, %v102
    %v425 = vmul.f32 %v422, %v103
    %v426 = vmul.f32 %v421, %v104
    %v427 = vmul.f32 %v420, %v105
    %428 = vrot.lane.b32.xlu0 %v408, 16
    %v429 = vpop.permute.xlu0 %428
    %430 = vrot.lane.b32.xlu0 %v409, 16
    %v431 = vpop.permute.xlu0 %430
    %432 = vrot.lane.b32.xlu0 %v410, 16
    %v433 = vpop.permute.xlu0 %432
    %434 = vrot.lane.b32.xlu0 %v411, 16
    %v435 = vpop.permute.xlu0 %434
    %v436 = vsel %vm122, %v433, %v435
    %v437 = vsel %vm122, %v431, %v433
    %v438 = vsel %vm122, %v429, %v431
    %v439 = vsel %vm122, %v435, %v429
    %v440 = vmul.f32 %v439, %v128
    %v441 = vmul.f32 %v438, %v129
    %v442 = vmul.f32 %v437, %v130
    %v443 = vmul.f32 %v436, %v131
    %444 = vrot.lane.b32.xlu0 %v408, 15
    %v445 = vpop.permute.xlu0 %444
    %446 = vrot.lane.b32.xlu0 %v409, 15
    %v447 = vpop.permute.xlu0 %446
    %448 = vrot.lane.b32.xlu0 %v410, 15
    %v449 = vpop.permute.xlu0 %448
    %450 = vrot.lane.b32.xlu0 %v411, 15
    %v451 = vpop.permute.xlu0 %450
    %v452 = vsel %vm148, %v449, %v451
    %v453 = vsel %vm148, %v447, %v449
    %v454 = vsel %vm148, %v445, %v447
    %v455 = vsel %vm148, %v451, %v445
    %v456 = vmul.f32 %v455, %v154
    %v457 = vmul.f32 %v454, %v155
    %v458 = vmul.f32 %v453, %v156
    %v459 = vmul.f32 %v452, %v157
    %460 = vrot.lane.b32.xlu0 %v408, 1
    %v461 = vpop.permute.xlu0 %460
    %462 = vrot.lane.b32.xlu0 %v409, 1
    %v463 = vpop.permute.xlu0 %462
    %464 = vrot.lane.b32.xlu0 %v410, 1
    %v465 = vpop.permute.xlu0 %464
    %466 = vrot.lane.b32.xlu0 %v411, 1
    %v467 = vpop.permute.xlu0 %466
    %v468 = vsel %vm174, %v465, %v467
    %v469 = vsel %vm174, %v463, %v465
    %v470 = vsel %vm174, %v461, %v463
    %v471 = vsel %vm174, %v467, %v461
    %v472 = vmul.f32 %v471, %v180
    %v473 = vmul.f32 %v470, %v181
    %v474 = vmul.f32 %v469, %v182
    %v475 = vmul.f32 %v468, %v183
    %476 = vrot.lane.b32.xlu0 %v408, 127
    %v477 = vpop.permute.xlu0 %476
    %478 = vrot.lane.b32.xlu0 %v409, 127
    %v479 = vpop.permute.xlu0 %478
    %480 = vrot.lane.b32.xlu0 %v410, 127
    %v481 = vpop.permute.xlu0 %480
    %482 = vrot.lane.b32.xlu0 %v411, 127
    %v483 = vpop.permute.xlu0 %482
    %v484 = vsel %vm200, %v481, %v483
    %v485 = vsel %vm200, %v479, %v481
    %v486 = vsel %vm200, %v477, %v479
    %v487 = vsel %vm200, %v483, %v477
    %v488 = vmul.f32 %v486, %v206
    %v489 = vmul.f32 %v485, %v207
    %v490 = vmul.f32 %v484, %v208
    %v491 = vmul.f32 %v487, %v209
    %492 = vrot.lane.b32.xlu0 %v408, 113
    %v493 = vpop.permute.xlu0 %492
    %494 = vrot.lane.b32.xlu0 %v409, 113
    %v495 = vpop.permute.xlu0 %494
    %496 = vrot.lane.b32.xlu0 %v410, 113
    %v497 = vpop.permute.xlu0 %496
    %498 = vrot.lane.b32.xlu0 %v411, 113
    %v499 = vpop.permute.xlu0 %498
    %v500 = vsel %vm226, %v497, %v499
    %v501 = vsel %vm226, %v495, %v497
    %v502 = vsel %vm226, %v493, %v495
    %v503 = vsel %vm226, %v499, %v493
    %v504 = vmul.f32 %v502, %v232
    %v505 = vmul.f32 %v501, %v233
    %v506 = vmul.f32 %v500, %v234
    %v507 = vmul.f32 %v503, %v235
    %508 = vrot.lane.b32.xlu0 %v408, 112
    %v509 = vpop.permute.xlu0 %508
    %510 = vrot.lane.b32.xlu0 %v409, 112
    %v511 = vpop.permute.xlu0 %510
    %512 = vrot.lane.b32.xlu0 %v410, 112
    %v513 = vpop.permute.xlu0 %512
    %514 = vrot.lane.b32.xlu0 %v411, 112
    %v515 = vpop.permute.xlu0 %514
    %v516 = vsel %vm252, %v513, %v515
    %v517 = vsel %vm252, %v511, %v513
    %v518 = vsel %vm252, %v509, %v511
    %v519 = vsel %vm252, %v515, %v509
    %v520 = vmul.f32 %v518, %v258
    %v521 = vmul.f32 %v517, %v259
    %v522 = vmul.f32 %v516, %v260
    %v523 = vmul.f32 %v519, %v261
    %524 = vrot.lane.b32.xlu0 %v408, 111
    %v525 = vpop.permute.xlu0 %524
    %526 = vrot.lane.b32.xlu0 %v409, 111
    %v527 = vpop.permute.xlu0 %526
    %528 = vrot.lane.b32.xlu0 %v410, 111
    %v529 = vpop.permute.xlu0 %528
    %530 = vrot.lane.b32.xlu0 %v411, 111
    %v531 = vpop.permute.xlu0 %530
    %v532 = vsel %vm278, %v529, %v531
    %v533 = vsel %vm278, %v527, %v529
    %v534 = vsel %vm278, %v525, %v527
    %v535 = vsel %vm278, %v531, %v525
    %v536 = vmul.f32 %v534, %v284
    %v537 = vmul.f32 %v533, %v285
    %v538 = vmul.f32 %v532, %v286
    %v539 = vmul.f32 %v535, %v287
    %v540 = vpack.c.bf16 %v440, %v424
    %v541 = vpack.c.bf16 %v441, %v425
    %v542 = vpack.c.bf16 %v442, %v426
    %v543 = vpack.c.bf16 %v443, %v427
    %v544 = vpack.c.bf16 %v472, %v456
    %v545 = vpack.c.bf16 %v473, %v457
    %v546 = vpack.c.bf16 %v474, %v458
    %v547 = vpack.c.bf16 %v475, %v459
    %v548 = vpack.c.bf16 %v488, %v408
    %v549 = vpack.c.bf16 %v489, %v409
    %v550 = vpack.c.bf16 %v490, %v410
    %v551 = vpack.c.bf16 %v491, %v411
    %v552 = vpack.c.bf16 %v520, %v504
    %v553 = vpack.c.bf16 %v521, %v505
    %v554 = vpack.c.bf16 %v522, %v506
    %v555 = vpack.c.bf16 %v523, %v507
    %v556 = vpack.c.bf16 %v536, %v536
    %v557 = vpack.c.bf16 %v537, %v537
    %v558 = vpack.c.bf16 %v538, %v538
    %v559 = vpack.c.bf16 %v539, %v539
    %v560 = vld [vmem:[%s4] sm:$0xf]
    %v561 = vld [vmem:[%s5] sm:$0xff]
    %563 = vset.pattern.permute.xlu0 0
    %564 = vperm.xlu0 %563, %v561
    %v565 = vpop.permute.xlu0 %564
    %v568 = vsel %vm335, %v560, 0
    %v571 = vsel %vm339, %v556, 0
    %v574 = vsel %vm339, %v557, 0
    %v577 = vsel %vm339, %v558, 0
    %v580 = vsel %vm339, %v559, 0
    %582 = vmatpush.bf16.msra.mxu0 0
    %583 = vmatpush.bf16.msra.mxu0 0
    %584 = vmatpush.bf16.msra.mxu0 0
    %585 = vmatpush.bf16.msra.mxu0 %v571
    %586 = vmatpush.bf16.msra.mxu0 %v552
    %587 = vmatpush.bf16.msra.mxu0 %v548
    %588 = vmatpush.bf16.msra.mxu0 %v544
    %589 = vmatpush.bf16.msra.mxu0 %v540
    %590 = vmatmul.bf16.gmra.mxu0 %v568
    %v591 = vpop.f32.mrf.mxu0
    %v592 = vadd.f32 %v565, %v591
    %v593 = vpop.f32.mrf.mxu0
    %594 = vdwg.mxu0
    %595 = vmatpush.bf16.msra.mxu0 0
    %596 = vmatpush.bf16.msra.mxu0 0
    %597 = vmatpush.bf16.msra.mxu0 0
    %598 = vmatpush.bf16.msra.mxu0 %v574
    %599 = vmatpush.bf16.msra.mxu0 %v553
    %600 = vmatpush.bf16.msra.mxu0 %v549
    %601 = vmatpush.bf16.msra.mxu0 %v545
    %602 = vmatpush.bf16.msra.mxu0 %v541
    %603 = vmatmul.bf16.gmra.mxu0 %v568
    %v604 = vpop.f32.mrf.mxu0
    %v605 = vadd.f32 %v565, %v604
    %v606 = vpop.f32.mrf.mxu0
    %607 = vdwg.mxu0
    %608 = vmatpush.bf16.msra.mxu0 0
    %609 = vmatpush.bf16.msra.mxu0 0
    %610 = vmatpush.bf16.msra.mxu0 0
    %611 = vmatpush.bf16.msra.mxu0 %v577
    %612 = vmatpush.bf16.msra.mxu0 %v554
    %613 = vmatpush.bf16.msra.mxu0 %v550
    %614 = vmatpush.bf16.msra.mxu0 %v546
    %615 = vmatpush.bf16.msra.mxu0 %v542
    %616 = vmatmul.bf16.gmra.mxu0 %v568
    %v617 = vpop.f32.mrf.mxu0
    %v618 = vadd.f32 %v565, %v617
    %v619 = vpop.f32.mrf.mxu0
    %620 = vdwg.mxu0
    %621 = vmatpush.bf16.msra.mxu0 0
    %622 = vmatpush.bf16.msra.mxu0 0
    %623 = vmatpush.bf16.msra.mxu0 0
    %624 = vmatpush.bf16.msra.mxu0 %v580
    %625 = vmatpush.bf16.msra.mxu0 %v555
    %626 = vmatpush.bf16.msra.mxu0 %v551
    %627 = vmatpush.bf16.msra.mxu0 %v547
    %628 = vmatpush.bf16.msra.mxu0 %v543
    %629 = vmatmul.bf16.gmra.mxu0 %v568
    %v630 = vpop.f32.mrf.mxu0
    %v631 = vadd.f32 %v565, %v630
    %v632 = vpop.f32.mrf.mxu0
    %633 = vdwg.mxu0
    %v634 = vadd.f32 %v592, %v364
    %v635 = vadd.f32 %v605, %v378
    %v636 = vadd.f32 %v618, %v392
    %v637 = vadd.f32 %v631, %v406
    %v638 = vmax.f32 %v634, 0.0
    %v639 = vmax.f32 %v635, 0.0
    %v640 = vmax.f32 %v636, 0.0
    %v641 = vmax.f32 %v637, 0.0
    %642 = vst [vmem:[#allocation5] sm:$0xff] %v638
    %643 = vst [vmem:[#allocation5 + $0x8] sm:$0xff] %v639
    %s644 = scalar_lea.vmem [#allocation5], 16
    %645 = vst [vmem:[%s644] sm:$0xff] %v640
    %646 = vst [vmem:[%s644 + $0x8] sm:$0xff] %v641
    // Predicated region
    $region30: #{tpu_custom_call.1} parent=1 // pred_check
      _
    $region31: #{tpu_custom_call.1} parent=1 // pred_check_branch
      %648 = sbr.rel (0) target = $region33
    $region32: #{tpu_custom_call.1} parent=1 // pred_region
      %650 = vsyncadd [#allocation4], 0
      %s651 = sshll.u32 [#allocation5], 4
      %s652 = int_to_ptr.vmem [resolvable:$true] %s651
      %s653 = sshll.u32 %s6, 4
      %s654 = int_to_ptr.hbm [resolvable:$true] %s653
      %659 = dma.vmem_to_hbm [thread:$0]  %s652, 512, %s654, [#allocation4], 256, 256, 16
    $region33: #{tpu_custom_call.1} parent=1 // pred_fallthru
      _
    // Predicated region
    $region34: #{tpu_custom_call.1} parent=1 // pred_check
      _
    $region35: #{tpu_custom_call.1} parent=1 // pred_check_branch
      %661 = sbr.rel (0) target = $region37
    $region36: #{tpu_custom_call.1} parent=1 // pred_region
      %663 = dma.done [#allocation4], 512
    $region37: #{tpu_custom_call.1} parent=1 // pred_fallthru
      _
    %664 = vsyncpa [#allocation3], 1
    %665 = vsyncpa [#allocation4], 1

</llo_original>
